<compile_context>
chip_gen: v7x
topology: tpu7x:2x2x1
jax: 0.10.0
libtpu: 0.0.40
codegen_flags: <defaults>
</compile_context>

<pallas_src>
import functools

import jax
import jax.numpy as jnp
from jax.experimental import pallas as pl
from jax.experimental.pallas import tpu as pltpu


def _expand_kernel(x_ref, r_ref, e_ref, o_ref, *, gain):
    # x_ref: (1, s*s, 1, TH, W)  the s*s source planes for this (n, c', row-tile)
    # r_ref: (s, s*TH, TH)       row scatter:    R[a][s*h + a, h] = 1
    # e_ref: (s, W,    s*W)      column scatter: E[b][w, s*w + b] = 1
    # o_ref: (1, 1, s*TH, s*W)   interleaved output tile (lane-dense last dim)
    s = gain
    th, w = x_ref.shape[3], x_ref.shape[4]

    acc = jnp.zeros((s * th, s * w), jnp.float32)
    for a in range(s):
        rows = jnp.zeros((th, s * w), jnp.float32)
        for b in range(s):
            p = x_ref[0, a * s + b, 0, :, :].astype(jnp.float32)      # (TH, W)
            # place p's columns at lanes s*w + b
            rows = rows + jnp.dot(p, e_ref[b], preferred_element_type=jnp.float32)
        # place rows at output rows s*h + a
        acc = acc + jnp.dot(r_ref[a], rows, preferred_element_type=jnp.float32)

    o_ref[0, 0] = acc.astype(o_ref.dtype)


def _pick_row_tile(H, W, s, itemsize, budget_bytes=2 << 20):
    """Largest TH with TH | H and (TH % 8 == 0 or TH == H) under a VMEM budget."""
    if H % 8 != 0:
        return H            # must take the full (non-8-aligned) H as one block
    th = H
    while (th % 2 == 0 and (th // 2) % 8 == 0
           and s * s * th * W * itemsize > budget_bytes):
        th //= 2
    return th


def expand_pallas(x, gain=2):
    """x: (N, C, H, W) -> (N, C // gain**2, H * gain, W * gain)  (NCHW in/out)."""
    N, C, H, W = x.shape
    s = gain
    assert C % (s * s) == 0, "C must be divisible by gain**2"
    Cq = C // (s * s)

    TH = _pick_row_tile(H, W, s, x.dtype.itemsize)
    n_h = H // TH

    # Free (row-major compatible) reshape: channel index c = (a*s + b)*Cq + c'.
    x5 = x.reshape(N, s * s, Cq, H, W)

    # 0/1 scatter matrices (built once in the wrapper, constant across the grid).
    a_idx = jnp.arange(s, dtype=jnp.int32)
    E = (jnp.arange(s * W, dtype=jnp.int32)[None, None, :]
         == s * jnp.arange(W, dtype=jnp.int32)[None, :, None]
         + a_idx[:, None, None]).astype(jnp.float32)                 # (s, W, s*W)
    R = (jnp.arange(s * TH, dtype=jnp.int32)[None, :, None]
         == s * jnp.arange(TH, dtype=jnp.int32)[None, None, :]
         + a_idx[:, None, None]).astype(jnp.float32)                 # (s, s*TH, TH)

    flops_per_tile = 2 * s * s * TH * W * (s * W) + 2 * s * (s * TH) * TH * (s * W)
    cost = pl.CostEstimate(
        flops=int(N * Cq * n_h * flops_per_tile),
        transcendentals=0,
        bytes_accessed=int(2 * x.size * x.dtype.itemsize + (E.size + R.size) * 4),
    )

    out = pl.pallas_call(
        functools.partial(_expand_kernel, gain=s),
        out_shape=jax.ShapeDtypeStruct((N, Cq, s * H, s * W), x.dtype),
        grid_spec=pltpu.PrefetchScalarGridSpec(
            num_scalar_prefetch=0,
            grid=(N, Cq, n_h),
            in_specs=[
                # s*s input planes (strided over the original channel axis) per step
                pl.BlockSpec((1, s * s, 1, TH, W), lambda n, c, h: (n, 0, c, h, 0)),
                pl.BlockSpec((s, s * TH, TH), lambda n, c, h: (0, 0, 0)),   # R
                pl.BlockSpec((s, W, s * W), lambda n, c, h: (0, 0, 0)),     # E
            ],
            out_specs=pl.BlockSpec((1, 1, s * TH, s * W),
                                   lambda n, c, h: (n, c, h, 0)),
        ),
        compiler_params=pltpu.CompilerParams(
            dimension_semantics=("parallel", "parallel", "parallel")),
        cost_estimate=cost,
    )(x5, R, E)
    return out


def expand_reference(x, gain=2):
    """Pure-JAX mirror of the PyTorch Expand.forward (exact)."""
    N, C, H, W = x.shape
    s = gain
    y = x.reshape(N, s, s, C // (s * s), H, W)
    y = jnp.transpose(y, (0, 3, 4, 1, 5, 2))
    return y.reshape(N, C // (s * s), H * s, W * s)


if __name__ == "__main__":
    key = jax.random.PRNGKey(0)
    x = jax.random.normal(key, (2, 4, 16, 16), jnp.float32)   # N=2, C=4, H=W=16

    out = jax.block_until_ready(expand_pallas(x, gain=2))
    ref = jax.block_until_ready(expand_reference(x, gain=2))

    assert out.shape == (2, 1, 32, 32), out.shape
    max_err = float(jnp.max(jnp.abs(out - ref)))
    assert jnp.allclose(out, ref, atol=1e-4, rtol=1e-4), max_err

    print("KERNEL_OK")
</pallas_src>

<mosaic_0001>
module attributes {stable_mosaic.version = 11 : i64} {
  func.func @_expand_kernel(%arg0: i32, %arg1: i32, %arg2: i32, %arg3: memref<1x4x1x16x16xf32, #tpu.memory_space<vmem>>, %arg4: memref<2x32x16xf32, #tpu.memory_space<vmem>>, %arg5: memref<2x16x32xf32, #tpu.memory_space<vmem>>, %arg6: memref<1x1x32x32xf32, #tpu.memory_space<vmem>>) attributes {dimension_semantics = [#tpu.dimension_semantics<parallel>, #tpu.dimension_semantics<parallel>, #tpu.dimension_semantics<parallel>], iteration_bounds = array<i64: 2, 1, 1>, scalar_prefetch = 0 : i64, scratch_operands = 0 : i64, tpu.core_type = #tpu.core_type<tc>, window_params = [{transform_indices = @transform_0, window_bounds = array<i64: 1, 4, 1, 16, 16>}, {pipeline_mode = #tpu.pipeline_mode<synchronous>, transform_indices = @transform_1, window_bounds = array<i64: 2, 32, 16>}, {pipeline_mode = #tpu.pipeline_mode<synchronous>, transform_indices = @transform_2, window_bounds = array<i64: 2, 16, 32>}, {transform_indices = @transform_3, window_bounds = array<i64: 1, 1, 32, 32>}]} {
    %cst = arith.constant 0.000000e+00 : f32
    %0 = vector.broadcast %cst : f32 to vector<32x32xf32>
    %cst_0 = arith.constant 0.000000e+00 : f32
    %1 = vector.broadcast %cst_0 : f32 to vector<16x32xf32>
    %c0 = arith.constant 0 : index
    %c0_1 = arith.constant 0 : index
    %c0_2 = arith.constant 0 : index
    %c0_3 = arith.constant 0 : index
    %c0_4 = arith.constant 0 : index
    %2 = vector.load %arg3[%c0, %c0_1, %c0_2, %c0_3, %c0_4] : memref<1x4x1x16x16xf32, #tpu.memory_space<vmem>>, vector<1x1x1x16x16xf32>
    %3 = vector.shape_cast %2 : vector<1x1x1x16x16xf32> to vector<16x16xf32>
    %c0_5 = arith.constant 0 : index
    %c0_6 = arith.constant 0 : index
    %c0_7 = arith.constant 0 : index
    %4 = vector.load %arg5[%c0_5, %c0_6, %c0_7] : memref<2x16x32xf32, #tpu.memory_space<vmem>>, vector<1x16x32xf32>
    %5 = vector.shape_cast %4 : vector<1x16x32xf32> to vector<16x32xf32>
    %cst_8 = arith.constant dense<0.000000e+00> : vector<16x32xf32>
    %6 = tpu.matmul %3, %5, %cst_8 {dimension_numbers = #tpu.dot_dimension_numbers<[1], [0], [0], [1], [0, 0, 1, 1], [], []>} : vector<16x16xf32>, vector<16x32xf32>, vector<16x32xf32> -> vector<16x32xf32>
    %7 = arith.addf %1, %6 : vector<16x32xf32>
    %c0_9 = arith.constant 0 : index
    %c1 = arith.constant 1 : index
    %c0_10 = arith.constant 0 : index
    %c0_11 = arith.constant 0 : index
    %c0_12 = arith.constant 0 : index
    %8 = vector.load %arg3[%c0_9, %c1, %c0_10, %c0_11, %c0_12] : memref<1x4x1x16x16xf32, #tpu.memory_space<vmem>>, vector<1x1x1x16x16xf32>
    %9 = vector.shape_cast %8 : vector<1x1x1x16x16xf32> to vector<16x16xf32>
    %c1_13 = arith.constant 1 : index
    %c0_14 = arith.constant 0 : index
    %c0_15 = arith.constant 0 : index
    %10 = vector.load %arg5[%c1_13, %c0_14, %c0_15] : memref<2x16x32xf32, #tpu.memory_space<vmem>>, vector<1x16x32xf32>
    %11 = vector.shape_cast %10 : vector<1x16x32xf32> to vector<16x32xf32>
    %cst_16 = arith.constant dense<0.000000e+00> : vector<16x32xf32>
    %12 = tpu.matmul %9, %11, %cst_16 {dimension_numbers = #tpu.dot_dimension_numbers<[1], [0], [0], [1], [0, 0, 1, 1], [], []>} : vector<16x16xf32>, vector<16x32xf32>, vector<16x32xf32> -> vector<16x32xf32>
    %13 = arith.addf %7, %12 : vector<16x32xf32>
    %c0_17 = arith.constant 0 : index
    %c0_18 = arith.constant 0 : index
    %c0_19 = arith.constant 0 : index
    %14 = vector.load %arg4[%c0_17, %c0_18, %c0_19] : memref<2x32x16xf32, #tpu.memory_space<vmem>>, vector<1x32x16xf32>
    %15 = vector.shape_cast %14 : vector<1x32x16xf32> to vector<32x16xf32>
    %cst_20 = arith.constant dense<0.000000e+00> : vector<32x32xf32>
    %16 = tpu.matmul %15, %13, %cst_20 {dimension_numbers = #tpu.dot_dimension_numbers<[1], [0], [0], [1], [0, 0, 1, 1], [], []>} : vector<32x16xf32>, vector<16x32xf32>, vector<32x32xf32> -> vector<32x32xf32>
    %17 = arith.addf %0, %16 : vector<32x32xf32>
    %cst_21 = arith.constant 0.000000e+00 : f32
    %18 = vector.broadcast %cst_21 : f32 to vector<16x32xf32>
    %c0_22 = arith.constant 0 : index
    %c2 = arith.constant 2 : index
    %c0_23 = arith.constant 0 : index
    %c0_24 = arith.constant 0 : index
    %c0_25 = arith.constant 0 : index
    %19 = vector.load %arg3[%c0_22, %c2, %c0_23, %c0_24, %c0_25] : memref<1x4x1x16x16xf32, #tpu.memory_space<vmem>>, vector<1x1x1x16x16xf32>
    %20 = vector.shape_cast %19 : vector<1x1x1x16x16xf32> to vector<16x16xf32>
    %c0_26 = arith.constant 0 : index
    %c0_27 = arith.constant 0 : index
    %c0_28 = arith.constant 0 : index
    %21 = vector.load %arg5[%c0_26, %c0_27, %c0_28] : memref<2x16x32xf32, #tpu.memory_space<vmem>>, vector<1x16x32xf32>
    %22 = vector.shape_cast %21 : vector<1x16x32xf32> to vector<16x32xf32>
    %cst_29 = arith.constant dense<0.000000e+00> : vector<16x32xf32>
    %23 = tpu.matmul %20, %22, %cst_29 {dimension_numbers = #tpu.dot_dimension_numbers<[1], [0], [0], [1], [0, 0, 1, 1], [], []>} : vector<16x16xf32>, vector<16x32xf32>, vector<16x32xf32> -> vector<16x32xf32>
    %24 = arith.addf %18, %23 : vector<16x32xf32>
    %c0_30 = arith.constant 0 : index
    %c3 = arith.constant 3 : index
    %c0_31 = arith.constant 0 : index
    %c0_32 = arith.constant 0 : index
    %c0_33 = arith.constant 0 : index
    %25 = vector.load %arg3[%c0_30, %c3, %c0_31, %c0_32, %c0_33] : memref<1x4x1x16x16xf32, #tpu.memory_space<vmem>>, vector<1x1x1x16x16xf32>
    %26 = vector.shape_cast %25 : vector<1x1x1x16x16xf32> to vector<16x16xf32>
    %c1_34 = arith.constant 1 : index
    %c0_35 = arith.constant 0 : index
    %c0_36 = arith.constant 0 : index
    %27 = vector.load %arg5[%c1_34, %c0_35, %c0_36] : memref<2x16x32xf32, #tpu.memory_space<vmem>>, vector<1x16x32xf32>
    %28 = vector.shape_cast %27 : vector<1x16x32xf32> to vector<16x32xf32>
    %cst_37 = arith.constant dense<0.000000e+00> : vector<16x32xf32>
    %29 = tpu.matmul %26, %28, %cst_37 {dimension_numbers = #tpu.dot_dimension_numbers<[1], [0], [0], [1], [0, 0, 1, 1], [], []>} : vector<16x16xf32>, vector<16x32xf32>, vector<16x32xf32> -> vector<16x32xf32>
    %30 = arith.addf %24, %29 : vector<16x32xf32>
    %c1_38 = arith.constant 1 : index
    %c0_39 = arith.constant 0 : index
    %c0_40 = arith.constant 0 : index
    %31 = vector.load %arg4[%c1_38, %c0_39, %c0_40] : memref<2x32x16xf32, #tpu.memory_space<vmem>>, vector<1x32x16xf32>
    %32 = vector.shape_cast %31 : vector<1x32x16xf32> to vector<32x16xf32>
    %cst_41 = arith.constant dense<0.000000e+00> : vector<32x32xf32>
    %33 = tpu.matmul %32, %30, %cst_41 {dimension_numbers = #tpu.dot_dimension_numbers<[1], [0], [0], [1], [0, 0, 1, 1], [], []>} : vector<32x16xf32>, vector<16x32xf32>, vector<32x32xf32> -> vector<32x32xf32>
    %34 = arith.addf %17, %33 : vector<32x32xf32>
    %c0_42 = arith.constant 0 : index
    %c0_43 = arith.constant 0 : index
    %c0_44 = arith.constant 0 : index
    %c0_45 = arith.constant 0 : index
    %35 = vector.load %arg6[%c0_42, %c0_43, %c0_44, %c0_45] : memref<1x1x32x32xf32, #tpu.memory_space<vmem>>, vector<1x1x32x32xf32>
    %36 = vector.shape_cast %35 : vector<1x1x32x32xf32> to vector<32x32xf32>
    %37 = vector.shape_cast %34 : vector<32x32xf32> to vector<1x1x32x32xf32>
    tpu.vector_store %arg6[%c0_42, %c0_43, %c0_44, %c0_45], %37 {strides = array<i32>} : memref<1x1x32x32xf32, #tpu.memory_space<vmem>>, vector<1x1x32x32xf32>,
    return
  }
  func.func @transform_0(%arg0: i32, %arg1: i32, %arg2: i32) -> (i32, i32, i32, i32, i32) {
    %c0_i32 = arith.constant 0 : i32
    %c0_i32_0 = arith.constant 0 : i32
    %c0_i32_1 = arith.constant 0 : i32
    return %arg0, %c0_i32, %arg1, %arg2, %c0_i32_0 : i32, i32, i32, i32, i32
  }
  func.func @transform_1(%arg0: i32, %arg1: i32, %arg2: i32) -> (i32, i32, i32) {
    %c0_i32 = arith.constant 0 : i32
    %c0_i32_0 = arith.constant 0 : i32
    %c0_i32_1 = arith.constant 0 : i32
    %c0_i32_2 = arith.constant 0 : i32
    return %c0_i32, %c0_i32_0, %c0_i32_1 : i32, i32, i32
  }
  func.func @transform_2(%arg0: i32, %arg1: i32, %arg2: i32) -> (i32, i32, i32) {
    %c0_i32 = arith.constant 0 : i32
    %c0_i32_0 = arith.constant 0 : i32
    %c0_i32_1 = arith.constant 0 : i32
    %c0_i32_2 = arith.constant 0 : i32
    return %c0_i32, %c0_i32_0, %c0_i32_1 : i32, i32, i32
  }
  func.func @transform_3(%arg0: i32, %arg1: i32, %arg2: i32) -> (i32, i32, i32, i32) {
    %c0_i32 = arith.constant 0 : i32
    %c0_i32_0 = arith.constant 0 : i32
    return %arg0, %arg1, %arg2, %c0_i32 : i32, i32, i32, i32
  }
}

</mosaic_0001>

<llo_original>
// kernel: tpu_custom_call.1
$region0: #{tpu_custom_call.1}
  #allocation0 [shape = 'u32[]', space=smem, size = 0x4, offset = 0x4, fixed_abs, tag = 'smem constant byte address 0x4 - core index']
  #allocation1 [shape = 'u32[144,128]{1,0:T(1,128)}', space=vmem, size = 0x12000, scoped, tag = 'internal scratch']
  %s0 = inlined_call_operand.hbm [shape: f32[2,4,1,16,16], index: 0, kind: input, shape index: {}]
  %s1 = inlined_call_operand.vmem [shape: f32[2,32,16], index: 1, kind: input, shape index: {}]
  %s2 = inlined_call_operand.vmem [shape: f32[2,16,32], index: 2, kind: input, shape index: {}]
  %s3 = inlined_call_operand.hbm [shape: f32[2,1,32,32], index: 3, kind: output, shape index: {}]
  %s4 = sld [smem:[#allocation0]]
  $region49: #{tpu_custom_call.1} parent=0
    _
  %s6 = ssub.s32 1, %s4
  %s7 = scalar_select 0, %s6, %s4
  $region1: #{tpu_custom_call.1} parent=0
    #allocation2 [shape = 'u8[65536]{0}', space=vmem, size = 0x10000, scoped, tag = 'input window, operand 0']
    #allocation3 [shape = 's32[2]{0}', space=sflag, size = 0x8, scoped, tag = 'scoped memory for tpu_custom_call.1']
    #allocation4 [shape = 's32[2]{0}', space=sflag, size = 0x8, scoped, tag = 'scoped memory for tpu_custom_call.1']
    #allocation5 [shape = 'u8[32768]{0}', space=vmem, size = 0x8000, scoped, tag = 'output window, operand 0']
    %8 = vsyncpa [#allocation3], 0
    %s9 = scalar_lea.sflag [#allocation3], 1
    %10 = vsyncpa %s9, 0
    %11 = vsyncpa [#allocation4], 0
    %s12 = scalar_lea.sflag [#allocation4], 1
    %13 = vsyncpa %s12, 0
    loop: start=0, step=1, limit=4
    $region2: #{tpu_custom_call.1} parent=1 // loop_pre_header
      _
    $region3: #{tpu_custom_call.1} parent=1 // loop_header
      %s15 = sphi 0, %s19
      %p16 = scmp.ge.s32.totalorder %s15, 4
      %s22 = sphi 0, %s41
      %s23 = sphi 0, %s37
      %s24 = sphi 0, %s33
      %s25 = sphi 0, %s22
      %s26 = sphi 0, %s23
      %s27 = sphi 0, %s24
      %s28 = sphi 0, %s25
      %s29 = sphi 0, %s26
      %s30 = sphi 0, %s27
      %s48 = sphi 0, %s50
      %s51 = sphi 0, %s48
      %s52 = sphi 0, %s51
      %s68 = sphi 0, %s52
      %s72 = sphi 0, %s72
      %s74 = sphi 0, %s72
      %s75 = sphi 0, %s74
      %s89 = sphi 0, %s75
      %s93 = sphi 0, %s93
      %s95 = sphi 0, %s93
      %s96 = sphi 0, %s95
      %s110 = sphi 0, %s96
      %s120 = sphi 0, %s122
      %s123 = sphi 0, %s120
      %s124 = sphi 0, %s123
      %s140 = sphi 0, %s124
    $region4: #{tpu_custom_call.1} parent=1 // loop_header_branch
      %18 = sbr.rel (%p16) target = $region8
    $region5: #{tpu_custom_call.1} parent=1 // loop_body
      %s20 = ssub.s32 %s15, 1
      %s21 = ssub.s32 %s15, 2
      %s31 = sadd.s32 1, %s24
      %p32 = scmp.ge.s32.totalorder %s31, 1
      %s33 = scalar_select %p32, 0, %s31
      %s34 = sadd.s32 1, %s23
      %s35 = scalar_select %p32, %s34, %s23
      %p36 = scmp.ge.s32.totalorder %s35, 1
      %s37 = scalar_select %p36, 0, %s35
      %s38 = sadd.s32 1, %s22
      %s39 = scalar_select %p36, %s38, %s22
      %p40 = scmp.ge.s32.totalorder %s39, 2
      %s41 = scalar_select %p40, 0, %s39
      %s42 = ssub.s32 %s22, %s41
      %s43 = ssub.s32 %s23, %s37
      %s44 = sor.u32 %s42, %s43
      %s45 = ssub.s32 %s24, %s33
      %s46 = sor.u32 %s44, %s45
      %p47 = scmp.eq.s32.totalorder %s46, 0
      %s49 = sadd.s32 %s48, 1
      %s50 = scalar_select %p47, %s48, %s49
      %p53 = pneg %p47
      %p54 = scmp.eq.s32.totalorder %s15, 1
      %p55 = por %p53, %p54
      %p56 = scmp.ne.s32.totalorder %s48, %s51
      %p57 = scmp.eq.s32.totalorder %s15, 0
      %p58 = por %p56, %p57
      %p59 = scmp.ne.s32.totalorder %s48, %s51
      %p60 = scmp.eq.s32.totalorder %s20, 1
      %p61 = por %p59, %p60
      %p62 = scmp.ne.s32.totalorder %s51, %s52
      %p63 = scmp.eq.s32.totalorder %s20, 0
      %p64 = por %p62, %p63
      %p65 = scmp.ne.s32.totalorder %s51, %s52
      %p66 = scmp.eq.s32.totalorder %s21, 1
      %p67 = por %p65, %p66
      %p69 = scmp.ne.s32.totalorder %s52, %s68
      %p70 = scmp.eq.s32.totalorder %s21, 0
      %p71 = por %p69, %p70
      %s73 = sadd.s32 %s72, 1
      %p76 = scmp.eq.s32.totalorder %s15, 1
      %p77 = scmp.ne.s32.totalorder %s72, %s74
      %p78 = scmp.eq.s32.totalorder %s15, 0
      %p79 = por %p77, %p78
      %p80 = scmp.ne.s32.totalorder %s72, %s74
      %p81 = scmp.eq.s32.totalorder %s20, 1
      %p82 = por %p80, %p81
      %p83 = scmp.ne.s32.totalorder %s74, %s75
      %p84 = scmp.eq.s32.totalorder %s20, 0
      %p85 = por %p83, %p84
      %p86 = scmp.ne.s32.totalorder %s74, %s75
      %p87 = scmp.eq.s32.totalorder %s21, 1
      %p88 = por %p86, %p87
      %p90 = scmp.ne.s32.totalorder %s75, %s89
      %p91 = scmp.eq.s32.totalorder %s21, 0
      %p92 = por %p90, %p91
      %s94 = sadd.s32 %s93, 1
      %p97 = scmp.eq.s32.totalorder %s15, 1
      %p98 = scmp.ne.s32.totalorder %s93, %s95
      %p99 = scmp.eq.s32.totalorder %s15, 0
      %p100 = por %p98, %p99
      %p101 = scmp.ne.s32.totalorder %s93, %s95
      %p102 = scmp.eq.s32.totalorder %s20, 1
      %p103 = por %p101, %p102
      %p104 = scmp.ne.s32.totalorder %s95, %s96
      %p105 = scmp.eq.s32.totalorder %s20, 0
      %p106 = por %p104, %p105
      %p107 = scmp.ne.s32.totalorder %s95, %s96
      %p108 = scmp.eq.s32.totalorder %s21, 1
      %p109 = por %p107, %p108
      %p111 = scmp.ne.s32.totalorder %s96, %s110
      %p112 = scmp.eq.s32.totalorder %s21, 0
      %p113 = por %p111, %p112
      %s114 = ssub.s32 %s22, %s41
      %s115 = ssub.s32 %s23, %s37
      %s116 = sor.u32 %s114, %s115
      %s117 = ssub.s32 %s24, %s33
      %s118 = sor.u32 %s116, %s117
      %p119 = scmp.eq.s32.totalorder %s118, 0
      %s121 = sadd.s32 %s120, 1
      %s122 = scalar_select %p119, %s120, %s121
      %p125 = pneg %p119
      %p126 = scmp.eq.s32.totalorder %s15, 1
      %p127 = por %p125, %p126
      %p128 = scmp.ne.s32.totalorder %s120, %s123
      %p129 = scmp.eq.s32.totalorder %s15, 0
      %p130 = por %p128, %p129
      %p131 = scmp.ne.s32.totalorder %s120, %s123
      %p132 = scmp.eq.s32.totalorder %s20, 1
      %p133 = por %p131, %p132
      %p134 = scmp.ne.s32.totalorder %s123, %s124
      %p135 = scmp.eq.s32.totalorder %s20, 0
      %p136 = por %p134, %p135
      %p137 = scmp.ne.s32.totalorder %s123, %s124
      %p138 = scmp.eq.s32.totalorder %s21, 1
      %p139 = por %p137, %p138
      %p141 = scmp.ne.s32.totalorder %s124, %s140
      %p142 = scmp.eq.s32.totalorder %s21, 0
      %p143 = por %p141, %p142
      %p144 = scmp.le.s32.totalorder 1, %s15
      %p145 = scmp.lt.s32.totalorder %s15, 3
      %p146 = pnand %p144, %p145
      %p147 = pneg %p146
      // Predicated region
      $region9: #{tpu_custom_call.1} parent=5 // pred_check
        _
      $region10: #{tpu_custom_call.1} parent=5 // pred_check_branch
        %149 = sbr.rel (%p146) target = $region12
      $region11: #{tpu_custom_call.1} parent=5 // pred_region
        %s150 = ssub.s32 %s15, 1
        // Predicated region
        $region13: #{tpu_custom_call.1} parent=11 // pred_check
          %p151 = pneg %p85
        $region14: #{tpu_custom_call.1} parent=11 // pred_check_branch
          %153 = sbr.rel (%p151) target = $region16
        $region15: #{tpu_custom_call.1} parent=11 // pred_region
          _
        $region16: #{tpu_custom_call.1} parent=11 // pred_fallthru
          _
        // Predicated region
        $region17: #{tpu_custom_call.1} parent=11 // pred_check
          %p154 = pneg %p106
        $region18: #{tpu_custom_call.1} parent=11 // pred_check_branch
          %156 = sbr.rel (%p154) target = $region20
        $region19: #{tpu_custom_call.1} parent=11 // pred_region
          _
        $region20: #{tpu_custom_call.1} parent=11 // pred_fallthru
          _
      $region12: #{tpu_custom_call.1} parent=5 // pred_fallthru
        _
      %p157 = scmp.lt.s32.totalorder %s15, 2
      // Predicated region
      $region21: #{tpu_custom_call.1} parent=5 // pred_check
        %p158 = pneg %p157
      $region22: #{tpu_custom_call.1} parent=5 // pred_check_branch
        %160 = sbr.rel (%p158) target = $region24
      $region23: #{tpu_custom_call.1} parent=5 // pred_region
        // Predicated region
        $region25: #{tpu_custom_call.1} parent=23 // pred_check
          %p161 = pneg %p58
        $region26: #{tpu_custom_call.1} parent=23 // pred_check_branch
          %163 = sbr.rel (%p161) target = $region28
        $region27: #{tpu_custom_call.1} parent=23 // pred_region
          %s164 = sand.u32 %s48, 1
          %s165 = scalar_lea.sflag [#allocation3], %s164
          %s166 = sand.u32 %s48, 1
          %s167 = smul.addr %s166, 64
          %s168 = scalar_lea.vmem [#allocation2], %s167
          %s169 = smul.u32 2, %s24
          %s171 = ssub.s32 1024, 1024
          %172 = vsyncadd %s165, %s171
          %s173 = smul.addr %s23, 2
          %s174 = sadd.s32 %s169, %s173
          %s175 = smul.addr %s22, 8
          %s176 = sadd.s32 %s174, %s175
          %s177 = smul.addr %s176, 128
          %s178 = scalar_lea.hbm %s0, %s177
          %s179 = sshll.u32 %s168, 4
          %s180 = int_to_ptr.vmem [resolvable:$true] %s179
          %185 = dma.hbm_to_vmem [thread:$0]  %s178, 1024, %s180, %s165, 128, 128, 8
        $region28: #{tpu_custom_call.1} parent=23 // pred_fallthru
          _
      $region24: #{tpu_custom_call.1} parent=5 // pred_fallthru
        _
      %p186 = scmp.le.s32.totalorder 1, %s15
      %p187 = scmp.lt.s32.totalorder %s15, 3
      %p188 = pnand %p186, %p187
      %p189 = pneg %p188
      // Predicated region
      $region29: #{tpu_custom_call.1} parent=5 // pred_check
        _
      $region30: #{tpu_custom_call.1} parent=5 // pred_check_branch
        %191 = sbr.rel (%p188) target = $region32
      $region31: #{tpu_custom_call.1} parent=5 // pred_region
        %s192 = ssub.s32 %s15, 1
        %s193 = sand.u32 %s51, 1
        %s194 = scalar_lea.sflag [#allocation3], %s193
        %s195 = sand.u32 %s51, 1
        %s196 = smul.addr %s195, 64
        %s197 = scalar_lea.vmem [#allocation2], %s196
        // Predicated region
        $region33: #{tpu_custom_call.1} parent=31 // pred_check
          %p198 = pneg %p64
        $region34: #{tpu_custom_call.1} parent=31 // pred_check_branch
          %200 = sbr.rel (%p198) target = $region36
        $region35: #{tpu_custom_call.1} parent=31 // pred_region
          %201 = dma.done %s194, 1024
        $region36: #{tpu_custom_call.1} parent=31 // pred_fallthru
          _
        %s202 = sand.u32 %s51, 1
        %s203 = scalar_lea.sflag [#allocation3], %s202
        %s204 = sand.u32 %s51, 1
        %s205 = smul.addr %s204, 64
        %s206 = scalar_lea.vmem [#allocation2], %s205
        %p207 = pneg %p64
        %p208 = pneg %p61
        %p209 = pneg %p85
        %p210 = pneg %p82
        %p211 = pneg %p106
        %p212 = pneg %p103
        %p213 = pneg %p136
        %p214 = pneg %p133
        %s215 = sand.u32 %s123, 1
        %s216 = scalar_lea.sflag [#allocation4], %s215
        %s217 = sand.u32 %s123, 1
        %s218 = smul.addr %s217, 32
        %s219 = scalar_lea.vmem [#allocation5], %s218
        %s220 = smul.u32 2, %s27
        %s221 = smul.u32 4, %s27
        %v222 = vld [vmem:[%s197] sm:$0xff]
        %v223 = vld [vmem:[%s197 + $0x8] sm:$0xff]
        %v224 = vld [vmem:[%s2] sm:$0xff]
        %v225 = vld [vmem:[%s2 + $0x8] sm:$0xff]
        %s226 = scalar_lea.vmem %s197, 16 [#allocation2]
        %v227 = vld [vmem:[%s226] sm:$0xff]
        %v228 = vld [vmem:[%s226 + $0x8] sm:$0xff]
        %s229 = scalar_lea.vmem %s2, 16
        %v230 = vld [vmem:[%s229] sm:$0xff]
        %v231 = vld [vmem:[%s229 + $0x8] sm:$0xff]
        %vm232 = vcmask 130048
        %v234 = vsel %vm232, %v227, 0
        %v237 = vsel %vm232, %v228, 0
        %239 = vmatprep.subr.mxu0 0.0
        %240 = vmatpush1.msra.mxu0 %v230
        %241 = vmatprep.subr.mxu0 0.0
        %242 = vmatpush1.msra.mxu0 %v231
        %243 = vmatprep.subr.mxu0 0.0
        %244 = vmatpush1.msra.mxu0 0.0
        %245 = vmatprep.subr.mxu0 0.0
        %246 = vmatpush1.msra.mxu0 0.0
        %247 = vmatprep.subr.mxu0 0.0
        %248 = vmatpush1.msra.mxu0 0.0
        %249 = vmatprep.subr.mxu0 0.0
        %250 = vmatpush1.msra.mxu0 0.0
        %251 = vmatprep.subr.mxu0 0.0
        %252 = vmatpush1.msra.mxu0 0.0
        %253 = vmatprep.subr.mxu0 0.0
        %254 = vmatpush1.msra.mxu0 0.0
        %255 = vmatprep.subr.mxu0 0.0
        %256 = vmatpush1.msra.mxu0 0.0
        %257 = vmatprep.subr.mxu0 0.0
        %258 = vmatpush1.msra.mxu0 0.0
        %259 = vmatprep.subr.mxu0 0.0
        %260 = vmatpush1.msra.mxu0 0.0
        %261 = vmatprep.subr.mxu0 0.0
        %262 = vmatpush1.msra.mxu0 0.0
        %263 = vmatprep.subr.mxu0 0.0
        %264 = vmatpush1.msra.mxu0 0.0
        %265 = vmatprep.subr.mxu0 0.0
        %266 = vmatpush1.msra.mxu0 0.0
        %267 = vmatprep.subr.mxu0 0.0
        %268 = vmatpush1.msra.mxu0 0.0
        %269 = vmatprep.subr.mxu0 0.0
        %270 = vmatpush1.msra.mxu0 0.0
        %271 = vmatprep.subr.mxu0 0.0
        %272 = vmatpush1.msra.mxu0 0.0
        %273 = vmatprep.subr.mxu0 0.0
        %274 = vmatpush1.msra.mxu0 0.0
        %275 = vmatprep.subr.mxu0 0.0
        %276 = vmatpush1.msra.mxu0 0.0
        %277 = vmatprep.subr.mxu0 0.0
        %278 = vmatpush1.msra.mxu0 0.0
        %279 = vmatprep.subr.mxu0 0.0
        %280 = vmatpush1.msra.mxu0 0.0
        %281 = vmatprep.subr.mxu0 0.0
        %282 = vmatpush1.msra.mxu0 0.0
        %283 = vmatprep.subr.mxu0 0.0
        %284 = vmatpush1.msra.mxu0 0.0
        %285 = vmatprep.subr.mxu0 0.0
        %286 = vmatpush1.msra.mxu0 0.0
        %287 = vmatprep.subr.mxu0 0.0
        %288 = vmatpush1.msra.mxu0 0.0
        %289 = vmatprep.subr.mxu0 0.0
        %290 = vmatpush1.msra.mxu0 0.0
        %291 = vmatprep.subr.mxu0 0.0
        %292 = vmatpush1.msra.mxu0 0.0
        %293 = vmatprep.subr.mxu0 0.0
        %294 = vmatpush1.msra.mxu0 0.0
        %295 = vmatprep.subr.mxu0 0.0
        %296 = vmatpush1.msra.mxu0 0.0
        %297 = vmatprep.subr.mxu0 0.0
        %298 = vmatpush1.msra.mxu0 0.0
        %299 = vmatprep.subr.mxu0 0.0
        %300 = vmatpush1.msra.mxu0 0.0
        %301 = vmatprep.subr.mxu0 0.0
        %302 = vmatpush1.msra.mxu0 0.0
        %303 = vmatprep.mubr.f32.mxu0 0.0
        %304 = vmatmul.mubr.f32.gmra.mrb[0].mxu0 %v234
        %v305 = vpop.f32.mrb[0].mxu0
        %v306 = vadd.f32 0.0, %v305
        %v307 = vpop.f32.mrb[0].mxu0
        %308 = vmatprep.mubr.f32.mxu0 0.0
        %309 = vmatmul.mubr.f32.gmra.mrb[0].mxu0 %v237
        %v310 = vpop.f32.mrb[0].mxu0
        %v311 = vadd.f32 0.0, %v310
        %v312 = vpop.f32.mrb[0].mxu0
        %313 = vdwg.mxu0
        %v315 = vsel %vm232, %v222, 0
        %v318 = vsel %vm232, %v223, 0
        %320 = vmatprep.subr.mxu0 0.0
        %321 = vmatpush1.msra.mxu0 %v224
        %322 = vmatprep.subr.mxu0 0.0
        %323 = vmatpush1.msra.mxu0 %v225
        %324 = vmatprep.subr.mxu0 0.0
        %325 = vmatpush1.msra.mxu0 0.0
        %326 = vmatprep.subr.mxu0 0.0
        %327 = vmatpush1.msra.mxu0 0.0
        %328 = vmatprep.subr.mxu0 0.0
        %329 = vmatpush1.msra.mxu0 0.0
        %330 = vmatprep.subr.mxu0 0.0
        %331 = vmatpush1.msra.mxu0 0.0
        %332 = vmatprep.subr.mxu0 0.0
        %333 = vmatpush1.msra.mxu0 0.0
        %334 = vmatprep.subr.mxu0 0.0
        %335 = vmatpush1.msra.mxu0 0.0
        %336 = vmatprep.subr.mxu0 0.0
        %337 = vmatpush1.msra.mxu0 0.0
        %338 = vmatprep.subr.mxu0 0.0
        %339 = vmatpush1.msra.mxu0 0.0
        %340 = vmatprep.subr.mxu0 0.0
        %341 = vmatpush1.msra.mxu0 0.0
        %342 = vmatprep.subr.mxu0 0.0
        %343 = vmatpush1.msra.mxu0 0.0
        %344 = vmatprep.subr.mxu0 0.0
        %345 = vmatpush1.msra.mxu0 0.0
        %346 = vmatprep.subr.mxu0 0.0
        %347 = vmatpush1.msra.mxu0 0.0
        %348 = vmatprep.subr.mxu0 0.0
        %349 = vmatpush1.msra.mxu0 0.0
        %350 = vmatprep.subr.mxu0 0.0
        %351 = vmatpush1.msra.mxu0 0.0
        %352 = vmatprep.subr.mxu0 0.0
        %353 = vmatpush1.msra.mxu0 0.0
        %354 = vmatprep.subr.mxu0 0.0
        %355 = vmatpush1.msra.mxu0 0.0
        %356 = vmatprep.subr.mxu0 0.0
        %357 = vmatpush1.msra.mxu0 0.0
        %358 = vmatprep.subr.mxu0 0.0
        %359 = vmatpush1.msra.mxu0 0.0
        %360 = vmatprep.subr.mxu0 0.0
        %361 = vmatpush1.msra.mxu0 0.0
        %362 = vmatprep.subr.mxu0 0.0
        %363 = vmatpush1.msra.mxu0 0.0
        %364 = vmatprep.subr.mxu0 0.0
        %365 = vmatpush1.msra.mxu0 0.0
        %366 = vmatprep.subr.mxu0 0.0
        %367 = vmatpush1.msra.mxu0 0.0
        %368 = vmatprep.subr.mxu0 0.0
        %369 = vmatpush1.msra.mxu0 0.0
        %370 = vmatprep.subr.mxu0 0.0
        %371 = vmatpush1.msra.mxu0 0.0
        %372 = vmatprep.subr.mxu0 0.0
        %373 = vmatpush1.msra.mxu0 0.0
        %374 = vmatprep.subr.mxu0 0.0
        %375 = vmatpush1.msra.mxu0 0.0
        %376 = vmatprep.subr.mxu0 0.0
        %377 = vmatpush1.msra.mxu0 0.0
        %378 = vmatprep.subr.mxu0 0.0
        %379 = vmatpush1.msra.mxu0 0.0
        %380 = vmatprep.subr.mxu0 0.0
        %381 = vmatpush1.msra.mxu0 0.0
        %382 = vmatprep.subr.mxu0 0.0
        %383 = vmatpush1.msra.mxu0 0.0
        %384 = vmatprep.mubr.f32.mxu0 0.0
        %385 = vmatmul.mubr.f32.gmra.mrb[0].mxu0 %v315
        %v386 = vpop.f32.mrb[0].mxu0
        %v387 = vadd.f32 %v306, %v386
        %v388 = vpop.f32.mrb[0].mxu0
        %389 = vmatprep.mubr.f32.mxu0 0.0
        %390 = vmatmul.mubr.f32.gmra.mrb[0].mxu0 %v318
        %v391 = vpop.f32.mrb[0].mxu0
        %v392 = vadd.f32 %v311, %v391
        %v393 = vpop.f32.mrb[0].mxu0
        %394 = vdwg.mxu0
        %v395 = vld [vmem:[%s1] sm:$0xff]
        %v396 = vld [vmem:[%s1 + $0x8] sm:$0xff]
        %v397 = vld [vmem:[%s1 + $0x10] sm:$0xff]
        %v398 = vld [vmem:[%s1 + $0x18] sm:$0xff]
        %s399 = scalar_lea.vmem %s197, 32 [#allocation2]
        %v400 = vld [vmem:[%s399] sm:$0xff]
        %v401 = vld [vmem:[%s399 + $0x8] sm:$0xff]
        %s402 = scalar_lea.vmem %s197, 48 [#allocation2]
        %v403 = vld [vmem:[%s402] sm:$0xff]
        %v404 = vld [vmem:[%s402 + $0x8] sm:$0xff]
        %v406 = vsel %vm232, %v403, 0
        %v409 = vsel %vm232, %v404, 0
        %411 = vmatprep.subr.mxu0 0.0
        %412 = vmatpush1.msra.mxu0 %v230
        %413 = vmatprep.subr.mxu0 0.0
        %414 = vmatpush1.msra.mxu0 %v231
        %415 = vmatprep.subr.mxu0 0.0
        %416 = vmatpush1.msra.mxu0 0.0
        %417 = vmatprep.subr.mxu0 0.0
        %418 = vmatpush1.msra.mxu0 0.0
        %419 = vmatprep.subr.mxu0 0.0
        %420 = vmatpush1.msra.mxu0 0.0
        %421 = vmatprep.subr.mxu0 0.0
        %422 = vmatpush1.msra.mxu0 0.0
        %423 = vmatprep.subr.mxu0 0.0
        %424 = vmatpush1.msra.mxu0 0.0
        %425 = vmatprep.subr.mxu0 0.0
        %426 = vmatpush1.msra.mxu0 0.0
        %427 = vmatprep.subr.mxu0 0.0
        %428 = vmatpush1.msra.mxu0 0.0
        %429 = vmatprep.subr.mxu0 0.0
        %430 = vmatpush1.msra.mxu0 0.0
        %431 = vmatprep.subr.mxu0 0.0
        %432 = vmatpush1.msra.mxu0 0.0
        %433 = vmatprep.subr.mxu0 0.0
        %434 = vmatpush1.msra.mxu0 0.0
        %435 = vmatprep.subr.mxu0 0.0
        %436 = vmatpush1.msra.mxu0 0.0
        %437 = vmatprep.subr.mxu0 0.0
        %438 = vmatpush1.msra.mxu0 0.0
        %439 = vmatprep.subr.mxu0 0.0
        %440 = vmatpush1.msra.mxu0 0.0
        %441 = vmatprep.subr.mxu0 0.0
        %442 = vmatpush1.msra.mxu0 0.0
        %443 = vmatprep.subr.mxu0 0.0
        %444 = vmatpush1.msra.mxu0 0.0
        %445 = vmatprep.subr.mxu0 0.0
        %446 = vmatpush1.msra.mxu0 0.0
        %447 = vmatprep.subr.mxu0 0.0
        %448 = vmatpush1.msra.mxu0 0.0
        %449 = vmatprep.subr.mxu0 0.0
        %450 = vmatpush1.msra.mxu0 0.0
        %451 = vmatprep.subr.mxu0 0.0
        %452 = vmatpush1.msra.mxu0 0.0
        %453 = vmatprep.subr.mxu0 0.0
        %454 = vmatpush1.msra.mxu0 0.0
        %455 = vmatprep.subr.mxu0 0.0
        %456 = vmatpush1.msra.mxu0 0.0
        %457 = vmatprep.subr.mxu0 0.0
        %458 = vmatpush1.msra.mxu0 0.0
        %459 = vmatprep.subr.mxu0 0.0
        %460 = vmatpush1.msra.mxu0 0.0
        %461 = vmatprep.subr.mxu0 0.0
        %462 = vmatpush1.msra.mxu0 0.0
        %463 = vmatprep.subr.mxu0 0.0
        %464 = vmatpush1.msra.mxu0 0.0
        %465 = vmatprep.subr.mxu0 0.0
        %466 = vmatpush1.msra.mxu0 0.0
        %467 = vmatprep.subr.mxu0 0.0
        %468 = vmatpush1.msra.mxu0 0.0
        %469 = vmatprep.subr.mxu0 0.0
        %470 = vmatpush1.msra.mxu0 0.0
        %471 = vmatprep.subr.mxu0 0.0
        %472 = vmatpush1.msra.mxu0 0.0
        %473 = vmatprep.subr.mxu0 0.0
        %474 = vmatpush1.msra.mxu0 0.0
        %475 = vmatprep.mubr.f32.mxu0 0.0
        %476 = vmatmul.mubr.f32.gmra.mrb[0].mxu0 %v406
        %v477 = vpop.f32.mrb[0].mxu0
        %v478 = vadd.f32 0.0, %v477
        %v479 = vpop.f32.mrb[0].mxu0
        %480 = vmatprep.mubr.f32.mxu0 0.0
        %481 = vmatmul.mubr.f32.gmra.mrb[0].mxu0 %v409
        %v482 = vpop.f32.mrb[0].mxu0
        %v483 = vadd.f32 0.0, %v482
        %v484 = vpop.f32.mrb[0].mxu0
        %485 = vdwg.mxu0
        %v487 = vsel %vm232, %v400, 0
        %v490 = vsel %vm232, %v401, 0
        %492 = vmatprep.subr.mxu0 0.0
        %493 = vmatpush1.msra.mxu0 %v224
        %494 = vmatprep.subr.mxu0 0.0
        %495 = vmatpush1.msra.mxu0 %v225
        %496 = vmatprep.subr.mxu0 0.0
        %497 = vmatpush1.msra.mxu0 0.0
        %498 = vmatprep.subr.mxu0 0.0
        %499 = vmatpush1.msra.mxu0 0.0
        %500 = vmatprep.subr.mxu0 0.0
        %501 = vmatpush1.msra.mxu0 0.0
        %502 = vmatprep.subr.mxu0 0.0
        %503 = vmatpush1.msra.mxu0 0.0
        %504 = vmatprep.subr.mxu0 0.0
        %505 = vmatpush1.msra.mxu0 0.0
        %506 = vmatprep.subr.mxu0 0.0
        %507 = vmatpush1.msra.mxu0 0.0
        %508 = vmatprep.subr.mxu0 0.0
        %509 = vmatpush1.msra.mxu0 0.0
        %510 = vmatprep.subr.mxu0 0.0
        %511 = vmatpush1.msra.mxu0 0.0
        %512 = vmatprep.subr.mxu0 0.0
        %513 = vmatpush1.msra.mxu0 0.0
        %514 = vmatprep.subr.mxu0 0.0
        %515 = vmatpush1.msra.mxu0 0.0
        %516 = vmatprep.subr.mxu0 0.0
        %517 = vmatpush1.msra.mxu0 0.0
        %518 = vmatprep.subr.mxu0 0.0
        %519 = vmatpush1.msra.mxu0 0.0
        %520 = vmatprep.subr.mxu0 0.0
        %521 = vmatpush1.msra.mxu0 0.0
        %522 = vmatprep.subr.mxu0 0.0
        %523 = vmatpush1.msra.mxu0 0.0
        %524 = vmatprep.subr.mxu0 0.0
        %525 = vmatpush1.msra.mxu0 0.0
        %526 = vmatprep.subr.mxu0 0.0
        %527 = vmatpush1.msra.mxu0 0.0
        %528 = vmatprep.subr.mxu0 0.0
        %529 = vmatpush1.msra.mxu0 0.0
        %530 = vmatprep.subr.mxu0 0.0
        %531 = vmatpush1.msra.mxu0 0.0
        %532 = vmatprep.subr.mxu0 0.0
        %533 = vmatpush1.msra.mxu0 0.0
        %534 = vmatprep.subr.mxu0 0.0
        %535 = vmatpush1.msra.mxu0 0.0
        %536 = vmatprep.subr.mxu0 0.0
        %537 = vmatpush1.msra.mxu0 0.0
        %538 = vmatprep.subr.mxu0 0.0
        %539 = vmatpush1.msra.mxu0 0.0
        %540 = vmatprep.subr.mxu0 0.0
        %541 = vmatpush1.msra.mxu0 0.0
        %542 = vmatprep.subr.mxu0 0.0
        %543 = vmatpush1.msra.mxu0 0.0
        %544 = vmatprep.subr.mxu0 0.0
        %545 = vmatpush1.msra.mxu0 0.0
        %546 = vmatprep.subr.mxu0 0.0
        %547 = vmatpush1.msra.mxu0 0.0
        %548 = vmatprep.subr.mxu0 0.0
        %549 = vmatpush1.msra.mxu0 0.0
        %550 = vmatprep.subr.mxu0 0.0
        %551 = vmatpush1.msra.mxu0 0.0
        %552 = vmatprep.subr.mxu0 0.0
        %553 = vmatpush1.msra.mxu0 0.0
        %554 = vmatprep.subr.mxu0 0.0
        %555 = vmatpush1.msra.mxu0 0.0
        %556 = vmatprep.mubr.f32.mxu0 0.0
        %557 = vmatmul.mubr.f32.gmra.mrb[0].mxu0 %v487
        %v558 = vpop.f32.mrb[0].mxu0
        %v559 = vadd.f32 %v478, %v558
        %v560 = vpop.f32.mrb[0].mxu0
        %561 = vmatprep.mubr.f32.mxu0 0.0
        %562 = vmatmul.mubr.f32.gmra.mrb[0].mxu0 %v490
        %v563 = vpop.f32.mrb[0].mxu0
        %v564 = vadd.f32 %v483, %v563
        %v565 = vpop.f32.mrb[0].mxu0
        %566 = vdwg.mxu0
        %s567 = scalar_lea.vmem %s1, 32
        %v568 = vld [vmem:[%s567] sm:$0xff]
        %v569 = vld [vmem:[%s567 + $0x8] sm:$0xff]
        %v570 = vld [vmem:[%s567 + $0x10] sm:$0xff]
        %v571 = vld [vmem:[%s567 + $0x18] sm:$0xff]
        %v573 = vsel %vm232, %v568, 0
        %v576 = vsel %vm232, %v569, 0
        %v579 = vsel %vm232, %v570, 0
        %v582 = vsel %vm232, %v571, 0
        %584 = vmatprep.subr.mxu0 0.0
        %585 = vmatpush1.msra.mxu0 %v559
        %586 = vmatprep.subr.mxu0 0.0
        %587 = vmatpush1.msra.mxu0 %v564
        %588 = vmatprep.subr.mxu0 0.0
        %589 = vmatpush1.msra.mxu0 0.0
        %590 = vmatprep.subr.mxu0 0.0
        %591 = vmatpush1.msra.mxu0 0.0
        %592 = vmatprep.subr.mxu0 0.0
        %593 = vmatpush1.msra.mxu0 0.0
        %594 = vmatprep.subr.mxu0 0.0
        %595 = vmatpush1.msra.mxu0 0.0
        %596 = vmatprep.subr.mxu0 0.0
        %597 = vmatpush1.msra.mxu0 0.0
        %598 = vmatprep.subr.mxu0 0.0
        %599 = vmatpush1.msra.mxu0 0.0
        %600 = vmatprep.subr.mxu0 0.0
        %601 = vmatpush1.msra.mxu0 0.0
        %602 = vmatprep.subr.mxu0 0.0
        %603 = vmatpush1.msra.mxu0 0.0
        %604 = vmatprep.subr.mxu0 0.0
        %605 = vmatpush1.msra.mxu0 0.0
        %606 = vmatprep.subr.mxu0 0.0
        %607 = vmatpush1.msra.mxu0 0.0
        %608 = vmatprep.subr.mxu0 0.0
        %609 = vmatpush1.msra.mxu0 0.0
        %610 = vmatprep.subr.mxu0 0.0
        %611 = vmatpush1.msra.mxu0 0.0
        %612 = vmatprep.subr.mxu0 0.0
        %613 = vmatpush1.msra.mxu0 0.0
        %614 = vmatprep.subr.mxu0 0.0
        %615 = vmatpush1.msra.mxu0 0.0
        %616 = vmatprep.subr.mxu0 0.0
        %617 = vmatpush1.msra.mxu0 0.0
        %618 = vmatprep.subr.mxu0 0.0
        %619 = vmatpush1.msra.mxu0 0.0
        %620 = vmatprep.subr.mxu0 0.0
        %621 = vmatpush1.msra.mxu0 0.0
        %622 = vmatprep.subr.mxu0 0.0
        %623 = vmatpush1.msra.mxu0 0.0
        %624 = vmatprep.subr.mxu0 0.0
        %625 = vmatpush1.msra.mxu0 0.0
        %626 = vmatprep.subr.mxu0 0.0
        %627 = vmatpush1.msra.mxu0 0.0
        %628 = vmatprep.subr.mxu0 0.0
        %629 = vmatpush1.msra.mxu0 0.0
        %630 = vmatprep.subr.mxu0 0.0
        %631 = vmatpush1.msra.mxu0 0.0
        %632 = vmatprep.subr.mxu0 0.0
        %633 = vmatpush1.msra.mxu0 0.0
        %634 = vmatprep.subr.mxu0 0.0
        %635 = vmatpush1.msra.mxu0 0.0
        %636 = vmatprep.subr.mxu0 0.0
        %637 = vmatpush1.msra.mxu0 0.0
        %638 = vmatprep.subr.mxu0 0.0
        %639 = vmatpush1.msra.mxu0 0.0
        %640 = vmatprep.subr.mxu0 0.0
        %641 = vmatpush1.msra.mxu0 0.0
        %642 = vmatprep.subr.mxu0 0.0
        %643 = vmatpush1.msra.mxu0 0.0
        %644 = vmatprep.subr.mxu0 0.0
        %645 = vmatpush1.msra.mxu0 0.0
        %646 = vmatprep.subr.mxu0 0.0
        %647 = vmatpush1.msra.mxu0 0.0
        %648 = vmatprep.mubr.f32.mxu0 0.0
        %649 = vmatmul.mubr.f32.gmra.mrb[0].mxu0 %v573
        %v650 = vpop.f32.mrb[0].mxu0
        %v651 = vadd.f32 0.0, %v650
        %v652 = vpop.f32.mrb[0].mxu0
        %653 = vmatprep.mubr.f32.mxu0 0.0
        %654 = vmatmul.mubr.f32.gmra.mrb[0].mxu0 %v576
        %v655 = vpop.f32.mrb[0].mxu0
        %v656 = vadd.f32 0.0, %v655
        %v657 = vpop.f32.mrb[0].mxu0
        %658 = vmatprep.mubr.f32.mxu0 0.0
        %659 = vmatmul.mubr.f32.gmra.mrb[0].mxu0 %v579
        %v660 = vpop.f32.mrb[0].mxu0
        %v661 = vadd.f32 0.0, %v660
        %v662 = vpop.f32.mrb[0].mxu0
        %663 = vmatprep.mubr.f32.mxu0 0.0
        %664 = vmatmul.mubr.f32.gmra.mrb[0].mxu0 %v582
        %v665 = vpop.f32.mrb[0].mxu0
        %v666 = vadd.f32 0.0, %v665
        %v667 = vpop.f32.mrb[0].mxu0
        %668 = vdwg.mxu0
        %v670 = vsel %vm232, %v395, 0
        %v673 = vsel %vm232, %v396, 0
        %v676 = vsel %vm232, %v397, 0
        %v679 = vsel %vm232, %v398, 0
        %681 = vmatprep.subr.mxu0 0.0
        %682 = vmatpush1.msra.mxu0 %v387
        %683 = vmatprep.subr.mxu0 0.0
        %684 = vmatpush1.msra.mxu0 %v392
        %685 = vmatprep.subr.mxu0 0.0
        %686 = vmatpush1.msra.mxu0 0.0
        %687 = vmatprep.subr.mxu0 0.0
        %688 = vmatpush1.msra.mxu0 0.0
        %689 = vmatprep.subr.mxu0 0.0
        %690 = vmatpush1.msra.mxu0 0.0
        %691 = vmatprep.subr.mxu0 0.0
        %692 = vmatpush1.msra.mxu0 0.0
        %693 = vmatprep.subr.mxu0 0.0
        %694 = vmatpush1.msra.mxu0 0.0
        %695 = vmatprep.subr.mxu0 0.0
        %696 = vmatpush1.msra.mxu0 0.0
        %697 = vmatprep.subr.mxu0 0.0
        %698 = vmatpush1.msra.mxu0 0.0
        %699 = vmatprep.subr.mxu0 0.0
        %700 = vmatpush1.msra.mxu0 0.0
        %701 = vmatprep.subr.mxu0 0.0
        %702 = vmatpush1.msra.mxu0 0.0
        %703 = vmatprep.subr.mxu0 0.0
        %704 = vmatpush1.msra.mxu0 0.0
        %705 = vmatprep.subr.mxu0 0.0
        %706 = vmatpush1.msra.mxu0 0.0
        %707 = vmatprep.subr.mxu0 0.0
        %708 = vmatpush1.msra.mxu0 0.0
        %709 = vmatprep.subr.mxu0 0.0
        %710 = vmatpush1.msra.mxu0 0.0
        %711 = vmatprep.subr.mxu0 0.0
        %712 = vmatpush1.msra.mxu0 0.0
        %713 = vmatprep.subr.mxu0 0.0
        %714 = vmatpush1.msra.mxu0 0.0
        %715 = vmatprep.subr.mxu0 0.0
        %716 = vmatpush1.msra.mxu0 0.0
        %717 = vmatprep.subr.mxu0 0.0
        %718 = vmatpush1.msra.mxu0 0.0
        %719 = vmatprep.subr.mxu0 0.0
        %720 = vmatpush1.msra.mxu0 0.0
        %721 = vmatprep.subr.mxu0 0.0
        %722 = vmatpush1.msra.mxu0 0.0
        %723 = vmatprep.subr.mxu0 0.0
        %724 = vmatpush1.msra.mxu0 0.0
        %725 = vmatprep.subr.mxu0 0.0
        %726 = vmatpush1.msra.mxu0 0.0
        %727 = vmatprep.subr.mxu0 0.0
        %728 = vmatpush1.msra.mxu0 0.0
        %729 = vmatprep.subr.mxu0 0.0
        %730 = vmatpush1.msra.mxu0 0.0
        %731 = vmatprep.subr.mxu0 0.0
        %732 = vmatpush1.msra.mxu0 0.0
        %733 = vmatprep.subr.mxu0 0.0
        %734 = vmatpush1.msra.mxu0 0.0
        %735 = vmatprep.subr.mxu0 0.0
        %736 = vmatpush1.msra.mxu0 0.0
        %737 = vmatprep.subr.mxu0 0.0
        %738 = vmatpush1.msra.mxu0 0.0
        %739 = vmatprep.subr.mxu0 0.0
        %740 = vmatpush1.msra.mxu0 0.0
        %741 = vmatprep.subr.mxu0 0.0
        %742 = vmatpush1.msra.mxu0 0.0
        %743 = vmatprep.subr.mxu0 0.0
        %744 = vmatpush1.msra.mxu0 0.0
        %745 = vmatprep.mubr.f32.mxu0 0.0
        %746 = vmatmul.mubr.f32.gmra.mrb[0].mxu0 %v670
        %v747 = vpop.f32.mrb[0].mxu0
        %v748 = vadd.f32 %v651, %v747
        %v749 = vpop.f32.mrb[0].mxu0
        %750 = vmatprep.mubr.f32.mxu0 0.0
        %751 = vmatmul.mubr.f32.gmra.mrb[0].mxu0 %v673
        %v752 = vpop.f32.mrb[0].mxu0
        %v753 = vadd.f32 %v656, %v752
        %v754 = vpop.f32.mrb[0].mxu0
        %755 = vmatprep.mubr.f32.mxu0 0.0
        %756 = vmatmul.mubr.f32.gmra.mrb[0].mxu0 %v676
        %v757 = vpop.f32.mrb[0].mxu0
        %v758 = vadd.f32 %v661, %v757
        %v759 = vpop.f32.mrb[0].mxu0
        %760 = vmatprep.mubr.f32.mxu0 0.0
        %761 = vmatmul.mubr.f32.gmra.mrb[0].mxu0 %v679
        %v762 = vpop.f32.mrb[0].mxu0
        %v763 = vadd.f32 %v666, %v762
        %v764 = vpop.f32.mrb[0].mxu0
        %765 = vdwg.mxu0
        %vm766 = vcmask 261120
        %767 = vst.msk [vmem:[%s219] sm:$0xff] %vm766, %v748
        %768 = vst.msk [vmem:[%s219 + $0x8] sm:$0xff] %vm766, %v753
        %769 = vst.msk [vmem:[%s219 + $0x10] sm:$0xff] %vm766, %v758
        %770 = vst.msk [vmem:[%s219 + $0x18] sm:$0xff] %vm766, %v763
        %s771 = sand.u32 %s123, 1
        %s772 = scalar_lea.sflag [#allocation4], %s771
        %s773 = sand.u32 %s123, 1
        %s774 = smul.addr %s773, 32
        %s775 = scalar_lea.vmem [#allocation5], %s774
        // Predicated region
        $region37: #{tpu_custom_call.1} parent=31 // pred_check
          %p776 = pneg %p133
        $region38: #{tpu_custom_call.1} parent=31 // pred_check_branch
          %778 = sbr.rel (%p776) target = $region40
        $region39: #{tpu_custom_call.1} parent=31 // pred_region
          %s779 = smul.u32 4, %s27
          %s781 = ssub.s32 512, 512
          %782 = vsyncadd %s772, %s781
          %s783 = smul.addr %s26, 4
          %s784 = sadd.s32 %s779, %s783
          %s785 = smul.addr %s25, 4
          %s786 = sadd.s32 %s784, %s785
          %s787 = smul.addr %s786, 128
          %s788 = scalar_lea.hbm %s3, %s787
          %s789 = sshll.u32 %s775, 4
          %s790 = int_to_ptr.vmem [resolvable:$true] %s789
          %795 = dma.vmem_to_hbm [thread:$0]  %s790, 512, %s788, %s772, 128, 128, 8
        $region40: #{tpu_custom_call.1} parent=31 // pred_fallthru
          _
      $region32: #{tpu_custom_call.1} parent=5 // pred_fallthru
        _
      %p796 = scmp.le.s32.totalorder 2, %s15
      // Predicated region
      $region41: #{tpu_custom_call.1} parent=5 // pred_check
        %p797 = pneg %p796
      $region42: #{tpu_custom_call.1} parent=5 // pred_check_branch
        %799 = sbr.rel (%p797) target = $region44
      $region43: #{tpu_custom_call.1} parent=5 // pred_region
        %s800 = ssub.s32 %s15, 2
        // Predicated region
        $region45: #{tpu_custom_call.1} parent=43 // pred_check
          %p801 = pneg %p139
        $region46: #{tpu_custom_call.1} parent=43 // pred_check_branch
          %803 = sbr.rel (%p801) target = $region48
        $region47: #{tpu_custom_call.1} parent=43 // pred_region
          %s804 = sand.u32 %s124, 1
          %s805 = scalar_lea.sflag [#allocation4], %s804
          %s806 = sand.u32 %s124, 1
          %s807 = smul.addr %s806, 32
          %s808 = scalar_lea.vmem [#allocation5], %s807
          %809 = dma.done %s805, 512
        $region48: #{tpu_custom_call.1} parent=43 // pred_fallthru
          _
      $region44: #{tpu_custom_call.1} parent=5 // pred_fallthru
        _
    $region6: #{tpu_custom_call.1} parent=1 // loop_footer
      %s19 = sadd.s32 1, %s15
    $region7: #{tpu_custom_call.1} parent=1 // loop_footer_branch
      %14 = sbr.rel target = $region3
    $region8: #{tpu_custom_call.1} parent=1 // loop_exit
      _
    %810 = vsyncpa [#allocation3], 1
    %s811 = scalar_lea.sflag [#allocation3], 1
    %812 = vsyncpa %s811, 1
    %813 = vsyncpa [#allocation4], 1
    %s814 = scalar_lea.sflag [#allocation4], 1
    %815 = vsyncpa %s814, 1

</llo_original>
